<compile_context>
chip_gen: v7x
topology: tpu7x:2x2x1
jax: 0.10.0
libtpu: 0.0.40
codegen_flags: <defaults>
</compile_context>

<pallas_src>
import functools

import jax
import jax.numpy as jnp
from jax.experimental import pallas as pl
from jax.experimental.pallas import tpu as pltpu


def _trace_diff_kernel(first_ref, second_ref, w_ref, b_ref, out_ref, *, lane_dense):
    # Upcast on load; all math stays f32 (safe on v5e, which has no bf16 VPU).
    f = first_ref[...].astype(jnp.float32)                 # (TB, E)
    s = second_ref[...].astype(jnp.float32)                # (TB, E)
    w = w_ref[...].astype(jnp.float32)                     # (1, E), lane-aligned
    prod = jnp.abs(f - s) * w                              # VPU
    # Linear(E -> 1): lane reduce on the XLU (no MXU matvec).
    logits = jnp.sum(prod, axis=-1, keepdims=True)         # (TB, 1)
    if lane_dense:
        # Relayout to lanes early so the bias/sigmoid touch 16x fewer vregs and
        # the store is a full-lane, contiguous DMA.
        logits = jnp.transpose(logits)                     # (1, TB)  (XLU)
        out = jax.nn.sigmoid(logits + b_ref[0, 0])         # EUP
        out_ref[...] = out[None].astype(out_ref.dtype)     # (1, 1, TB)
    else:
        out = jax.nn.sigmoid(logits + b_ref[0, 0])         # (TB, 1)
        out_ref[...] = out.astype(out_ref.dtype)


def _round_up(x, m):
    return ((x + m - 1) // m) * m


def _vmem_capacity_bytes():
    """Physical VMEM per TensorCore; conservative fallback = v7x (64 MiB)."""
    try:
        info = pltpu.get_tpu_info()
        cap = getattr(info, "vmem_capacity_bytes", None)
        if cap:
            return int(cap)
    except Exception:
        pass
    return 64 * 1024 * 1024


def _choose_tile_rows(batch_rows, emb, itemsize, phys_vmem):
    """Byte-based batch-tile selection (review items 2/3)."""
    e_pad = _round_up(emb, 128)                      # lane-padded VMEM width
    # ~8 MiB of HBM bytes per input block: per-step DMA time >> 0.35us overhead.
    target_block_bytes = 8 * 1024 * 1024
    tb_bytes = max(8, target_block_bytes // max(1, emb * itemsize))
    # 2 inputs x 2 pipeline buffers of lane-padded rows must fit ~60% of
    # physical VMEM (leaves room for output buffers, weight, compiler scratch).
    budget = int(phys_vmem * 0.6)
    tb_vmem = max(8, budget // (2 * 2 * e_pad * itemsize))
    tb = min(tb_bytes, tb_vmem)
    # Never larger than the (8-row padded) batch.
    tb = min(tb, _round_up(batch_rows, 8))
    # >= 8 grid steps when the batch is large: >= 4 steps per v7x TensorCore
    # restores DMA/compute overlap inside each core.
    min_steps = 8
    if batch_rows >= min_steps * 1024:
        tb = min(tb, _round_up(pl.cdiv(batch_rows, min_steps), 256))
    if tb >= 256:
        tb = (tb // 256) * 256
    else:
        tb = max(8, (tb // 8) * 8)
    return int(tb)


def _run(first, second, weight2d, bias2d, tb, lane_dense, phys_vmem):
    """One pallas_call; returns a flat (>= B,) vector in original row order."""
    B, E = first.shape
    itemsize = jnp.dtype(first.dtype).itemsize
    grid_b = pl.cdiv(B, tb)
    e_pad = _round_up(E, 128)

    # Padded-footprint VMEM accounting (review item 6): double-buffered inputs,
    # replicated weight, double-buffered output block.
    in_bytes = 2 * 2 * tb * e_pad * itemsize
    w_bytes = 2 * 8 * e_pad * 4
    if lane_dense:
        out_bytes = 2 * 8 * _round_up(tb, 128) * 4
    else:
        out_bytes = 2 * _round_up(tb, 8) * 128 * 4
    need = in_bytes + w_bytes + out_bytes
    vmem_limit = int(min(phys_vmem, int(need * 1.2) + (4 << 20)))
    vmem_limit = max(vmem_limit, min(phys_vmem, 32 << 20))

    if lane_dense:
        # Output laid out with TB on the lane axis -> full-lane stores,
        # contiguous output DMA.  3-D shape keeps the block's last two dims
        # equal to the array's last two dims (satisfies the (8,128) rule).
        out_shape = jax.ShapeDtypeStruct((grid_b, 1, tb), jnp.float32)
        out_spec = pl.BlockSpec((1, 1, tb), lambda i: (i, 0, 0))
    else:
        out_shape = jax.ShapeDtypeStruct((B, 1), jnp.float32)
        out_spec = pl.BlockSpec((tb, 1), lambda i: (i, 0))

    kernel = functools.partial(_trace_diff_kernel, lane_dense=lane_dense)

    out = pl.pallas_call(
        kernel,
        out_shape=out_shape,
        grid_spec=pltpu.PrefetchScalarGridSpec(
            num_scalar_prefetch=0,
            grid=(grid_b,),
            in_specs=[
                pl.BlockSpec((tb, E), lambda i: (i, 0)),   # first
                pl.BlockSpec((tb, E), lambda i: (i, 0)),   # second
                pl.BlockSpec((1, E), lambda i: (0, 0)),    # weight (replicated)
                pl.BlockSpec(memory_space=pltpu.MemorySpace.SMEM),  # bias scalar
            ],
            out_specs=out_spec,
        ),
        compiler_params=pltpu.CompilerParams(
            dimension_semantics=("parallel",),
            vmem_limit_bytes=vmem_limit,
        ),
    )(first, second, weight2d, bias2d)

    if lane_dense:
        return out.reshape(-1)      # (grid_b * tb,), original row order
    return out[:, 0]                # (B,)


def learned_instruction_trace_difference(first, second, weight, bias):
    B, E = first.shape
    assert second.shape == (B, E)
    weight2d = jnp.asarray(weight, jnp.float32).reshape(1, E)   # lane-aligned
    bias2d = jnp.asarray(bias, jnp.float32).reshape(1, 1)       # SMEM scalar

    itemsize = jnp.dtype(first.dtype).itemsize
    phys_vmem = _vmem_capacity_bytes()
    tb = _choose_tile_rows(B, E, itemsize, phys_vmem)

    try:
        flat = _run(first, second, weight2d, bias2d, tb,
                    lane_dense=True, phys_vmem=phys_vmem)
        flat = jax.block_until_ready(flat)   # surface lowering/runtime errors here
    except Exception:
        # Safety net: some Mosaic builds may not lower the (TB,1)->(1,TB)
        # relayout.  Fall back to a lane-sparse output column with a smaller
        # tile (bounds the strided output DMA) instead of failing.
        flat = _run(first, second, weight2d, bias2d, min(tb, 1024),
                    lane_dense=False, phys_vmem=phys_vmem)

    result = flat[:B]                  # drop implicit-masking tail, (B,)
    return jnp.squeeze(result)         # torch .squeeze(): scalar if B == 1


def _reference(first, second, weight, bias):
    w = jnp.asarray(weight).reshape(-1)
    b = jnp.asarray(bias).reshape(())
    return jax.nn.sigmoid(jnp.abs(first - second) @ w + b)


if __name__ == "__main__":
    E = 32
    key = jax.random.PRNGKey(0)
    k1, k2, k3, k4, k5, k6 = jax.random.split(key, 6)

    bound = 1.0 / (E ** 0.5)
    weight = jax.random.uniform(k3, (1, E), minval=-bound, maxval=bound,
                                dtype=jnp.float32)   # nn.Linear(E, 1).weight
    bias = jax.random.uniform(k4, (1,), minval=-bound, maxval=bound,
                              dtype=jnp.float32)     # nn.Linear(E, 1).bias

    # Case 1: tile-aligned small batch.
    B = 8
    first = jax.random.normal(k1, (B, E), dtype=jnp.float32)
    second = jax.random.normal(k2, (B, E), dtype=jnp.float32)
    out = jax.block_until_ready(
        learned_instruction_trace_difference(first, second, weight, bias))
    ref = _reference(first, second, weight, bias)
    assert out.shape == (B,)
    assert jnp.allclose(out, ref, atol=1e-5, rtol=1e-5), (out, ref)

    # Case 2: ragged batch exercises the implicit partial-block (no-pad) path.
    B2 = 13
    first2 = jax.random.normal(k5, (B2, E), dtype=jnp.float32)
    second2 = jax.random.normal(k6, (B2, E), dtype=jnp.float32)
    out2 = jax.block_until_ready(
        learned_instruction_trace_difference(first2, second2, weight, bias))
    ref2 = _reference(first2, second2, weight, bias)
    assert out2.shape == (B2,)
    assert jnp.allclose(out2, ref2, atol=1e-5, rtol=1e-5), (out2, ref2)

    print("KERNEL_OK")
</pallas_src>

<mosaic_0001>
module attributes {stable_mosaic.version = 11 : i64} {
  func.func @_trace_diff_kernel(%arg0: i32, %arg1: memref<8x32xf32, #tpu.memory_space<vmem>>, %arg2: memref<8x32xf32, #tpu.memory_space<vmem>>, %arg3: memref<1x32xf32, #tpu.memory_space<vmem>>, %arg4: memref<1x1xf32, #tpu.memory_space<smem>>, %arg5: memref<1x1x8xf32, #tpu.memory_space<vmem>>) attributes {dimension_semantics = [#tpu.dimension_semantics<parallel>], iteration_bounds = array<i64: 1>, scalar_prefetch = 0 : i64, scratch_operands = 0 : i64, tpu.core_type = #tpu.core_type<tc>, window_params = [{transform_indices = @transform_0, window_bounds = array<i64: 8, 32>}, {transform_indices = @transform_1, window_bounds = array<i64: 8, 32>}, {pipeline_mode = #tpu.pipeline_mode<synchronous>, transform_indices = @transform_2, window_bounds = array<i64: 1, 32>}, {transform_indices = @transform_3, window_bounds = array<i64: 1, 1>}, {transform_indices = @transform_4, window_bounds = array<i64: 1, 1, 8>}]} {
    %c0 = arith.constant 0 : index
    %c0_0 = arith.constant 0 : index
    %0 = vector.load %arg1[%c0, %c0_0] : memref<8x32xf32, #tpu.memory_space<vmem>>, vector<8x32xf32>
    %c0_1 = arith.constant 0 : index
    %c0_2 = arith.constant 0 : index
    %1 = vector.load %arg2[%c0_1, %c0_2] : memref<8x32xf32, #tpu.memory_space<vmem>>, vector<8x32xf32>
    %c0_3 = arith.constant 0 : index
    %c0_4 = arith.constant 0 : index
    %2 = vector.load %arg3[%c0_3, %c0_4] : memref<1x32xf32, #tpu.memory_space<vmem>>, vector<1x32xf32>
    %3 = arith.subf %0, %1 : vector<8x32xf32>
    %4 = math.absf %3 : vector<8x32xf32>
    %5 = vector.broadcast %2 : vector<1x32xf32> to vector<8x32xf32>
    %6 = arith.mulf %4, %5 : vector<8x32xf32>
    %cst = arith.constant dense<0.000000e+00> : vector<8xf32>
    %7 = vector.multi_reduction <add>, %6, %cst [1] : vector<8x32xf32> to vector<8xf32>
    %8 = vector.shape_cast %7 : vector<8xf32> to vector<8x1xf32>
    %9 = tpu.transpose %8, [1, 0] : vector<8x1xf32> -> vector<1x8xf32>
    %c0_5 = arith.constant 0 : index
    %c0_6 = arith.constant 0 : index
    %10 = memref.load %arg4[%c0_5, %c0_6] : memref<1x1xf32, #tpu.memory_space<smem>>
    %11 = vector.broadcast %10 : f32 to vector<1x8xf32>
    %12 = arith.addf %9, %11 : vector<1x8xf32>
    %13 = arith.negf %12 : vector<1x8xf32>
    %14 = math.exp %13 : vector<1x8xf32>
    %cst_7 = arith.constant 1.000000e+00 : f32
    %15 = vector.broadcast %cst_7 : f32 to vector<1x8xf32>
    %16 = arith.addf %15, %14 : vector<1x8xf32>
    %17 = arith.divf %15, %16 : vector<1x8xf32>
    %18 = vector.shape_cast %17 : vector<1x8xf32> to vector<1x1x8xf32>
    %c0_8 = arith.constant 0 : index
    %c0_9 = arith.constant 0 : index
    %c0_10 = arith.constant 0 : index
    %19 = vector.load %arg5[%c0_8, %c0_9, %c0_10] : memref<1x1x8xf32, #tpu.memory_space<vmem>>, vector<1x1x8xf32>
    tpu.vector_store %arg5[%c0_8, %c0_9, %c0_10], %18 {strides = array<i32>} : memref<1x1x8xf32, #tpu.memory_space<vmem>>, vector<1x1x8xf32>,
    return
  }
  func.func @transform_0(%arg0: i32) -> (i32, i32) {
    %c0_i32 = arith.constant 0 : i32
    %c0_i32_0 = arith.constant 0 : i32
    return %arg0, %c0_i32 : i32, i32
  }
  func.func @transform_1(%arg0: i32) -> (i32, i32) {
    %c0_i32 = arith.constant 0 : i32
    %c0_i32_0 = arith.constant 0 : i32
    return %arg0, %c0_i32 : i32, i32
  }
  func.func @transform_2(%arg0: i32) -> (i32, i32) {
    %c0_i32 = arith.constant 0 : i32
    %c0_i32_0 = arith.constant 0 : i32
    %c0_i32_1 = arith.constant 0 : i32
    return %c0_i32, %c0_i32_0 : i32, i32
  }
  func.func @transform_3(%arg0: i32) -> (i32, i32) {
    %c0_i32 = arith.constant 0 : i32
    %c0_i32_0 = arith.constant 0 : i32
    %c0_i32_1 = arith.constant 0 : i32
    return %c0_i32, %c0_i32_0 : i32, i32
  }
  func.func @transform_4(%arg0: i32) -> (i32, i32, i32) {
    %c0_i32 = arith.constant 0 : i32
    %c0_i32_0 = arith.constant 0 : i32
    %c0_i32_1 = arith.constant 0 : i32
    return %arg0, %c0_i32, %c0_i32_0 : i32, i32, i32
  }
}

module attributes {stable_mosaic.version = 11 : i64} {
  func.func @_trace_diff_kernel(%arg0: i32, %arg1: memref<8x32xf32, #tpu.memory_space<vmem>>, %arg2: memref<8x32xf32, #tpu.memory_space<vmem>>, %arg3: memref<1x32xf32, #tpu.memory_space<vmem>>, %arg4: memref<1x1xf32, #tpu.memory_space<smem>>, %arg5: memref<8x1xf32, #tpu.memory_space<vmem>>) attributes {dimension_semantics = [#tpu.dimension_semantics<parallel>], iteration_bounds = array<i64: 1>, scalar_prefetch = 0 : i64, scratch_operands = 0 : i64, tpu.core_type = #tpu.core_type<tc>, window_params = [{transform_indices = @transform_0, window_bounds = array<i64: 8, 32>}, {transform_indices = @transform_1, window_bounds = array<i64: 8, 32>}, {pipeline_mode = #tpu.pipeline_mode<synchronous>, transform_indices = @transform_2, window_bounds = array<i64: 1, 32>}, {transform_indices = @transform_3, window_bounds = array<i64: 1, 1>}, {transform_indices = @transform_4, window_bounds = array<i64: 8, 1>}]} {
    %c0 = arith.constant 0 : index
    %c0_0 = arith.constant 0 : index
    %0 = vector.load %arg1[%c0, %c0_0] : memref<8x32xf32, #tpu.memory_space<vmem>>, vector<8x32xf32>
    %c0_1 = arith.constant 0 : index
    %c0_2 = arith.constant 0 : index
    %1 = vector.load %arg2[%c0_1, %c0_2] : memref<8x32xf32, #tpu.memory_space<vmem>>, vector<8x32xf32>
    %c0_3 = arith.constant 0 : index
    %c0_4 = arith.constant 0 : index
    %2 = vector.load %arg3[%c0_3, %c0_4] : memref<1x32xf32, #tpu.memory_space<vmem>>, vector<1x32xf32>
    %3 = arith.subf %0, %1 : vector<8x32xf32>
    %4 = math.absf %3 : vector<8x32xf32>
    %5 = vector.broadcast %2 : vector<1x32xf32> to vector<8x32xf32>
    %6 = arith.mulf %4, %5 : vector<8x32xf32>
    %cst = arith.constant dense<0.000000e+00> : vector<8xf32>
    %7 = vector.multi_reduction <add>, %6, %cst [1] : vector<8x32xf32> to vector<8xf32>
    %8 = vector.shape_cast %7 : vector<8xf32> to vector<8x1xf32>
    %c0_5 = arith.constant 0 : index
    %c0_6 = arith.constant 0 : index
    %9 = memref.load %arg4[%c0_5, %c0_6] : memref<1x1xf32, #tpu.memory_space<smem>>
    %10 = vector.broadcast %9 : f32 to vector<8x1xf32>
    %11 = arith.addf %8, %10 : vector<8x1xf32>
    %12 = arith.negf %11 : vector<8x1xf32>
    %13 = math.exp %12 : vector<8x1xf32>
    %cst_7 = arith.constant 1.000000e+00 : f32
    %14 = vector.broadcast %cst_7 : f32 to vector<8x1xf32>
    %15 = arith.addf %14, %13 : vector<8x1xf32>
    %16 = arith.divf %14, %15 : vector<8x1xf32>
    %c0_8 = arith.constant 0 : index
    %c0_9 = arith.constant 0 : index
    %17 = vector.load %arg5[%c0_8, %c0_9] : memref<8x1xf32, #tpu.memory_space<vmem>>, vector<8x1xf32>
    tpu.vector_store %arg5[%c0_8, %c0_9], %16 {strides = array<i32>} : memref<8x1xf32, #tpu.memory_space<vmem>>, vector<8x1xf32>,
    return
  }
  func.func @transform_0(%arg0: i32) -> (i32, i32) {
    %c0_i32 = arith.constant 0 : i32
    %c0_i32_0 = arith.constant 0 : i32
    return %arg0, %c0_i32 : i32, i32
  }
  func.func @transform_1(%arg0: i32) -> (i32, i32) {
    %c0_i32 = arith.constant 0 : i32
    %c0_i32_0 = arith.constant 0 : i32
    return %arg0, %c0_i32 : i32, i32
  }
  func.func @transform_2(%arg0: i32) -> (i32, i32) {
    %c0_i32 = arith.constant 0 : i32
    %c0_i32_0 = arith.constant 0 : i32
    %c0_i32_1 = arith.constant 0 : i32
    return %c0_i32, %c0_i32_0 : i32, i32
  }
  func.func @transform_3(%arg0: i32) -> (i32, i32) {
    %c0_i32 = arith.constant 0 : i32
    %c0_i32_0 = arith.constant 0 : i32
    %c0_i32_1 = arith.constant 0 : i32
    return %c0_i32, %c0_i32_0 : i32, i32
  }
  func.func @transform_4(%arg0: i32) -> (i32, i32) {
    %c0_i32 = arith.constant 0 : i32
    %c0_i32_0 = arith.constant 0 : i32
    return %arg0, %c0_i32 : i32, i32
  }
}

</mosaic_0001>

<llo_original>
// kernel: tpu_custom_call.1
$region0: #{tpu_custom_call.1}
  #allocation0 [shape = 'u32[]', space=smem, size = 0x4, offset = 0x4, fixed_abs, tag = 'smem constant byte address 0x4 - core index']
  #allocation1 [shape = 'u32[144,128]{1,0:T(1,128)}', space=vmem, size = 0x12000, scoped, tag = 'internal scratch']
  #allocation2 [shape = 'f32[1,1]{1,0:T(1,128)S(6)}', space=smem, size = 0x200, scoped, tag = 'scoped memory for tpu_custom_call.1']
  %s0 = inlined_call_operand.hbm [shape: f32[8,32], index: 0, kind: input, shape index: {}]
  %s1 = inlined_call_operand.hbm [shape: f32[8,32], index: 1, kind: input, shape index: {}]
  %s2 = inlined_call_operand.vmem [shape: f32[1,32], index: 2, kind: input, shape index: {}]
  %s3 = inlined_call_operand.<no memory space> [shape: f32[1,1], index: 3, kind: input, shape index: {}]
  %s4 = inlined_call_operand.hbm [shape: f32[1,1,8], index: 4, kind: output, shape index: {}]
  %s5 = sld [smem:[#allocation0]]
  $region34: #{tpu_custom_call.1} parent=0
    _
  %s7 = ssub.s32 1, %s5
  %s8 = scalar_select 0, %s7, %s5
  %9 = sst [smem:[#allocation2]] %s3
  $region1: #{tpu_custom_call.1} parent=0
    #allocation3 [shape = 'u8[4096]{0}', space=vmem, size = 0x1000, scoped, tag = 'input window, operand 0, single buffered']
    #allocation4 [shape = 's32[1]{0}', space=sflag, size = 0x4, scoped, tag = 'scoped memory for tpu_custom_call.1']
    #allocation5 [shape = 's32[1]{0}', space=sflag, size = 0x4, scoped, tag = 'scoped memory for tpu_custom_call.1']
    #allocation6 [shape = 'u8[4096]{0}', space=vmem, size = 0x1000, scoped, tag = 'input window, operand 1, single buffered']
    #allocation7 [shape = 's32[1]{0}', space=sflag, size = 0x4, scoped, tag = 'scoped memory for tpu_custom_call.1']
    #allocation8 [shape = 'u8[512]{0}', space=vmem, size = 0x400, scoped, tag = 'output window, operand 0, single buffered']
    %10 = vsyncpa [#allocation4], 0
    %11 = vsyncpa [#allocation7], 0
    %12 = vsyncpa [#allocation5], 0
    // Predicated region
    $region2: #{tpu_custom_call.1} parent=1 // pred_check
      _
    $region3: #{tpu_custom_call.1} parent=1 // pred_check_branch
      %14 = sbr.rel (0) target = $region5
    $region4: #{tpu_custom_call.1} parent=1 // pred_region
      %s16 = ssub.s32 128, 128
      %17 = vsyncadd [#allocation4], %s16
      %s19 = sshll.u32 [#allocation3], 4
      %s20 = int_to_ptr.vmem [resolvable:$true] %s19
      %22 = dma.hbm_to_vmem [thread:$0]  %s0, 128, %s20, [#allocation4]
    $region5: #{tpu_custom_call.1} parent=1 // pred_fallthru
      _
    // Predicated region
    $region6: #{tpu_custom_call.1} parent=1 // pred_check
      _
    $region7: #{tpu_custom_call.1} parent=1 // pred_check_branch
      %24 = sbr.rel (0) target = $region9
    $region8: #{tpu_custom_call.1} parent=1 // pred_region
      %s26 = ssub.s32 128, 128
      %27 = vsyncadd [#allocation7], %s26
      %s29 = sshll.u32 [#allocation6], 4
      %s30 = int_to_ptr.vmem [resolvable:$true] %s29
      %32 = dma.hbm_to_vmem [thread:$0]  %s1, 128, %s30, [#allocation7]
    $region9: #{tpu_custom_call.1} parent=1 // pred_fallthru
      _
    // Predicated region
    $region10: #{tpu_custom_call.1} parent=1 // pred_check
      _
    $region11: #{tpu_custom_call.1} parent=1 // pred_check_branch
      %34 = sbr.rel (0) target = $region13
    $region12: #{tpu_custom_call.1} parent=1 // pred_region
      _
    $region13: #{tpu_custom_call.1} parent=1 // pred_fallthru
      _
    // Predicated region
    $region14: #{tpu_custom_call.1} parent=1 // pred_check
      _
    $region15: #{tpu_custom_call.1} parent=1 // pred_check_branch
      %36 = sbr.rel (0) target = $region17
    $region16: #{tpu_custom_call.1} parent=1 // pred_region
      _
    $region17: #{tpu_custom_call.1} parent=1 // pred_fallthru
      _
    // Predicated region
    $region18: #{tpu_custom_call.1} parent=1 // pred_check
      _
    $region19: #{tpu_custom_call.1} parent=1 // pred_check_branch
      %38 = sbr.rel (0) target = $region21
    $region20: #{tpu_custom_call.1} parent=1 // pred_region
      %39 = dma.done [#allocation4], 128
    $region21: #{tpu_custom_call.1} parent=1 // pred_fallthru
      _
    // Predicated region
    $region22: #{tpu_custom_call.1} parent=1 // pred_check
      _
    $region23: #{tpu_custom_call.1} parent=1 // pred_check_branch
      %41 = sbr.rel (0) target = $region25
    $region24: #{tpu_custom_call.1} parent=1 // pred_region
      %42 = dma.done [#allocation7], 128
    $region25: #{tpu_custom_call.1} parent=1 // pred_fallthru
      _
    %v43 = vld [vmem:[#allocation3] sm:$0xff]
    %v44 = vld [vmem:[#allocation6] sm:$0xff]
    %v45 = vld [vmem:[%s2] sm:$0x1]
    %v46 = vsub.f32 %v43, %v44
    %v47 = vand.u32 2147483647, %v46
    %v49 = vlaneseq
    %v50 = vshrl.u32 %v49, 7
    %v51 = vsub.s32 0, %v50
    %v52 = vrot.slane %v45, %v51
    %v54 = vmul.f32 %v47, %v52
    %vm55 = vcmask 261120
    %v56 = vsel %vm55, %v54, 0.0
    %57 = vadd.xlane.f32.xlu0 %v56
    %v58 = vpop.xlane.xlu0 %57
    %59 = vxpose.xlu0.b32.start [1/16] %v58, 128
    %60 = vxpose.xlu0.b32.cont [2/16] 0.0, 128
    %61 = vxpose.xlu0.b32.cont [3/16] 0.0, 128
    %62 = vxpose.xlu0.b32.cont [4/16] 0.0, 128
    %63 = vxpose.xlu0.b32.cont [5/16] 0.0, 128
    %64 = vxpose.xlu0.b32.cont [6/16] 0.0, 128
    %65 = vxpose.xlu0.b32.cont [7/16] 0.0, 128
    %66 = vxpose.xlu0.b32.cont [8/16] 0.0, 128
    %67 = vxpose.xlu0.b32.cont [9/16] 0.0, 128
    %68 = vxpose.xlu0.b32.cont [10/16] 0.0, 128
    %69 = vxpose.xlu0.b32.cont [11/16] 0.0, 128
    %70 = vxpose.xlu0.b32.cont [12/16] 0.0, 128
    %71 = vxpose.xlu0.b32.cont [13/16] 0.0, 128
    %72 = vxpose.xlu0.b32.cont [14/16] 0.0, 128
    %73 = vxpose.xlu0.b32.cont [15/16] 0.0, 128
    %74 = vxpose.xlu0.b32.end [16/16] 0.0, 128
    %v75 = vpop.trf.xlu0
    %v76 = vpop.trf.xlu0
    %v77 = vpop.trf.xlu0
    %v78 = vpop.trf.xlu0
    %v79 = vpop.trf.xlu0
    %v80 = vpop.trf.xlu0
    %v81 = vpop.trf.xlu0
    %v82 = vpop.trf.xlu0
    %v83 = vpop.trf.xlu0
    %v84 = vpop.trf.xlu0
    %v85 = vpop.trf.xlu0
    %v86 = vpop.trf.xlu0
    %v87 = vpop.trf.xlu0
    %v88 = vpop.trf.xlu0
    %v89 = vpop.trf.xlu0
    %v90 = vpop.trf.xlu0
    %s91 = sld [smem:[#allocation2]]
    %v92 = vstv %s91
    %v93 = vadd.f32 %v75, %v92
    %v94 = vxor.u32 %v93, 2147483648
    %v95 = vmul.f32 %v94, 1.442695
    %v96 = vpow.pop %v95
    %v97 = vadd.f32 %v96, 1.0
    %v98 = vrcp.pop %v97
    %v99 = vmul.f32 1.0, %v98
    %vm100 = vcmask 57344
    %101 = vst.msk [vmem:[#allocation8] sm:$0x1] %vm100, %v99
    // Predicated region
    $region26: #{tpu_custom_call.1} parent=1 // pred_check
      _
    $region27: #{tpu_custom_call.1} parent=1 // pred_check_branch
      %103 = sbr.rel (0) target = $region29
    $region28: #{tpu_custom_call.1} parent=1 // pred_region
      %s105 = ssub.s32 16, 16
      %106 = vsyncadd [#allocation5], %s105
      %s108 = sshll.u32 [#allocation8], 4
      %s109 = int_to_ptr.vmem [resolvable:$true] %s108
      %111 = dma.vmem_to_hbm [thread:$0]  %s109, 16, %s4, [#allocation5]
    $region29: #{tpu_custom_call.1} parent=1 // pred_fallthru
      _
    // Predicated region
    $region30: #{tpu_custom_call.1} parent=1 // pred_check
      _
    $region31: #{tpu_custom_call.1} parent=1 // pred_check_branch
      %113 = sbr.rel (0) target = $region33
    $region32: #{tpu_custom_call.1} parent=1 // pred_region
      %114 = dma.done [#allocation5], 16
    $region33: #{tpu_custom_call.1} parent=1 // pred_fallthru
      _
    %115 = vsyncpa [#allocation4], 1
    %116 = vsyncpa [#allocation7], 1
    %117 = vsyncpa [#allocation5], 1

// kernel: tpu_custom_call.1
$region0: #{tpu_custom_call.1}
  #allocation0 [shape = 'u32[]', space=smem, size = 0x4, offset = 0x4, fixed_abs, tag = 'smem constant byte address 0x4 - core index']
  #allocation1 [shape = 'u32[144,128]{1,0:T(1,128)}', space=vmem, size = 0x12000, scoped, tag = 'internal scratch']
  #allocation2 [shape = 'f32[1,1]{1,0:T(1,128)S(6)}', space=smem, size = 0x200, scoped, tag = 'scoped memory for tpu_custom_call.1']
  %s0 = inlined_call_operand.hbm [shape: f32[8,32], index: 0, kind: input, shape index: {}]
  %s1 = inlined_call_operand.hbm [shape: f32[8,32], index: 1, kind: input, shape index: {}]
  %s2 = inlined_call_operand.vmem [shape: f32[1,32], index: 2, kind: input, shape index: {}]
  %s3 = inlined_call_operand.<no memory space> [shape: f32[1,1], index: 3, kind: input, shape index: {}]
  %s4 = inlined_call_operand.vmem [shape: f32[8,1], index: 4, kind: output, shape index: {}]
  %s5 = sld [smem:[#allocation0]]
  $region34: #{tpu_custom_call.1} parent=0
    _
  %s7 = ssub.s32 1, %s5
  %s8 = scalar_select 0, %s7, %s5
  %9 = sst [smem:[#allocation2]] %s3
  $region1: #{tpu_custom_call.1} parent=0
    #allocation3 [shape = 'u8[4096]{0}', space=vmem, size = 0x1000, scoped, tag = 'input window, operand 0, single buffered']
    #allocation4 [shape = 's32[1]{0}', space=sflag, size = 0x4, scoped, tag = 'scoped memory for tpu_custom_call.1']
    #allocation5 [shape = 'u8[4096]{0}', space=vmem, size = 0x1000, scoped, tag = 'input window, operand 1, single buffered']
    #allocation6 [shape = 's32[1]{0}', space=sflag, size = 0x4, scoped, tag = 'scoped memory for tpu_custom_call.1']
    %10 = vsyncpa [#allocation4], 0
    %11 = vsyncpa [#allocation6], 0
    // Predicated region
    $region2: #{tpu_custom_call.1} parent=1 // pred_check
      _
    $region3: #{tpu_custom_call.1} parent=1 // pred_check_branch
      %13 = sbr.rel (0) target = $region5
    $region4: #{tpu_custom_call.1} parent=1 // pred_region
      %s15 = ssub.s32 128, 128
      %16 = vsyncadd [#allocation4], %s15
      %s18 = sshll.u32 [#allocation3], 4
      %s19 = int_to_ptr.vmem [resolvable:$true] %s18
      %21 = dma.hbm_to_vmem [thread:$0]  %s0, 128, %s19, [#allocation4]
    $region5: #{tpu_custom_call.1} parent=1 // pred_fallthru
      _
    // Predicated region
    $region6: #{tpu_custom_call.1} parent=1 // pred_check
      _
    $region7: #{tpu_custom_call.1} parent=1 // pred_check_branch
      %23 = sbr.rel (0) target = $region9
    $region8: #{tpu_custom_call.1} parent=1 // pred_region
      %s25 = ssub.s32 128, 128
      %26 = vsyncadd [#allocation6], %s25
      %s28 = sshll.u32 [#allocation5], 4
      %s29 = int_to_ptr.vmem [resolvable:$true] %s28
      %31 = dma.hbm_to_vmem [thread:$0]  %s1, 128, %s29, [#allocation6]
    $region9: #{tpu_custom_call.1} parent=1 // pred_fallthru
      _
    // Predicated region
    $region10: #{tpu_custom_call.1} parent=1 // pred_check
      _
    $region11: #{tpu_custom_call.1} parent=1 // pred_check_branch
      %33 = sbr.rel (0) target = $region13
    $region12: #{tpu_custom_call.1} parent=1 // pred_region
      _
    $region13: #{tpu_custom_call.1} parent=1 // pred_fallthru
      _
    // Predicated region
    $region14: #{tpu_custom_call.1} parent=1 // pred_check
      _
    $region15: #{tpu_custom_call.1} parent=1 // pred_check_branch
      %35 = sbr.rel (0) target = $region17
    $region16: #{tpu_custom_call.1} parent=1 // pred_region
      _
    $region17: #{tpu_custom_call.1} parent=1 // pred_fallthru
      _
    // Predicated region
    $region18: #{tpu_custom_call.1} parent=1 // pred_check
      _
    $region19: #{tpu_custom_call.1} parent=1 // pred_check_branch
      %37 = sbr.rel (0) target = $region21
    $region20: #{tpu_custom_call.1} parent=1 // pred_region
      %38 = dma.done [#allocation4], 128
    $region21: #{tpu_custom_call.1} parent=1 // pred_fallthru
      _
    // Predicated region
    $region22: #{tpu_custom_call.1} parent=1 // pred_check
      _
    $region23: #{tpu_custom_call.1} parent=1 // pred_check_branch
      %40 = sbr.rel (0) target = $region25
    $region24: #{tpu_custom_call.1} parent=1 // pred_region
      %41 = dma.done [#allocation6], 128
    $region25: #{tpu_custom_call.1} parent=1 // pred_fallthru
      _
    %v42 = vld [vmem:[#allocation3] sm:$0xff]
    %v43 = vld [vmem:[#allocation5] sm:$0xff]
    %v44 = vld [vmem:[%s2] sm:$0x1]
    %v45 = vsub.f32 %v42, %v43
    %v46 = vand.u32 2147483647, %v45
    %v48 = vlaneseq
    %v49 = vshrl.u32 %v48, 7
    %v50 = vsub.s32 0, %v49
    %v51 = vrot.slane %v44, %v50
    %v53 = vmul.f32 %v46, %v51
    %vm54 = vcmask 261120
    %v55 = vsel %vm54, %v53, 0.0
    %56 = vadd.xlane.f32.xlu0 %v55
    %v57 = vpop.xlane.xlu0 %56
    %s58 = sld [smem:[#allocation2]]
    %v59 = vstv %s58
    %v60 = vadd.f32 %v57, %v59
    %v61 = vxor.u32 %v60, 2147483648
    %v62 = vmul.f32 %v61, 1.442695
    %v63 = vpow.pop %v62
    %v64 = vadd.f32 %v63, 1.0
    %v65 = vrcp.pop %v64
    %v66 = vmul.f32 1.0, %v65
    %vm67 = vcmask 7168
    %68 = vst.msk [vmem:[%s4] sm:$0xff] %vm67, %v66
    // Predicated region
    $region26: #{tpu_custom_call.1} parent=1 // pred_check
      _
    $region27: #{tpu_custom_call.1} parent=1 // pred_check_branch
      %70 = sbr.rel (0) target = $region29
    $region28: #{tpu_custom_call.1} parent=1 // pred_region
      _
    $region29: #{tpu_custom_call.1} parent=1 // pred_fallthru
      _
    // Predicated region
    $region30: #{tpu_custom_call.1} parent=1 // pred_check
      _
    $region31: #{tpu_custom_call.1} parent=1 // pred_check_branch
      %72 = sbr.rel (0) target = $region33
    $region32: #{tpu_custom_call.1} parent=1 // pred_region
      _
    $region33: #{tpu_custom_call.1} parent=1 // pred_fallthru
      _
    %73 = vsyncpa [#allocation4], 1
    %74 = vsyncpa [#allocation6], 1

</llo_original>
